<compile_context>
chip_gen: v6e
topology: v6e:2x2x1
jax: 0.10.0
libtpu: 0.0.40
codegen_flags: <defaults>
</compile_context>

<pallas_src>
import functools
import math

import jax
import jax.numpy as jnp
from jax.experimental import pallas as pl
from jax.experimental.pallas import tpu as pltpu


def _round_up(x, m):
    return ((x + m - 1) // m) * m


# ----------------------------- Pallas kernel ------------------------------

def _fused_heads_kernel(x_ref, p_ref, o_ref, *, f, lane):
    """Fused policy+value MLP: three lane-dense bf16 MXU matmuls.

    p_ref (bf16) packed parameter slab rows:
      [0, f)              W1_cat  (f, lane)     [policy W1 | value W1 | 0]
      [f, f+lane)         W2_cat  (lane, lane)  [policy W2 ; I (value pass-through)];
                                                b2 folded into row lane-1
      [f+lane, f+2*lane)  W3_cat  (lane, lane)  block-diag [policy W3 | value W2];
                                                b3 / vb2 folded into row lane-1
      [f+2*lane, +16)     bias block, row 0 = b1_cat (also plants the const-1 lane)
    """
    ow2 = f
    ow3 = f + lane
    ob = f + 2 * lane

    x = x_ref[...].astype(jnp.bfloat16)              # (TB, f) bf16 operands
    w1 = p_ref[0:f, :]                               # (f, lane)    bf16
    w2 = p_ref[ow2:ow3, :]                           # (lane, lane) bf16
    w3 = p_ref[ow3:ob, :]                            # (lane, lane) bf16
    b1 = p_ref[ob:ob + 1, :].astype(jnp.float32)     # (1, lane)

    # L1: x @ [pw1 | vw1 | 0] + b1 ; b1 also sets lane (lane-1) to the constant 1.
    h1 = jnp.maximum(
        jnp.dot(x, w1, preferred_element_type=jnp.float32) + b1, 0.0)
    # L2: policy mid layer + identity pass-through for the value branch
    #     (ReLU idempotent on the already >=0 value activations);
    #     b2 is folded into W2 row (lane-1) via the constant-1 lane.
    z = jnp.maximum(
        jnp.dot(h1.astype(jnp.bfloat16), w2,
                preferred_element_type=jnp.float32), 0.0)
    # L3: block-diagonal last layers; b3 / vb2 folded into W3 row (lane-1).
    out = jnp.dot(z.astype(jnp.bfloat16), w3,
                  preferred_element_type=jnp.float32)
    o_ref[...] = out.astype(o_ref.dtype)


def _fused_forward(x, packed, *, f, lane, pi_dim, vf_dim, max_tile_b=4096):
    B = x.shape[0]
    # Batch tile: as large as possible (per-step VMEM footprint is tiny), but
    # for large B cap it at ceil(B/2) rounded up to 8 so the "parallel" axis
    # has >=2 grid steps and can shard across v7x's two TensorCores.
    if B > max_tile_b:
        tb = max_tile_b
    elif B >= 256:
        tb = min(_round_up(-(-B // 2), 8), B)
    else:
        tb = B                                       # single latency-bound step
    grid = (pl.cdiv(B, tb),)
    p_rows = packed.shape[0]

    flops = int(2 * B * (f * lane + 2 * lane * lane))
    bytes_accessed = int(4 * B * f + 2 * p_rows * lane + 4 * B * lane)

    kernel = functools.partial(_fused_heads_kernel, f=f, lane=lane)
    out = pl.pallas_call(
        kernel,
        out_shape=jax.ShapeDtypeStruct((B, lane), jnp.float32),
        grid=grid,
        in_specs=[
            pl.BlockSpec((tb, f), lambda i: (i, 0)),          # x: tiled over batch
            pl.BlockSpec((p_rows, lane), lambda i: (0, 0)),   # params: VMEM-resident
        ],
        out_specs=pl.BlockSpec((tb, lane), lambda i: (i, 0)), # lane-dense (128) slab
        compiler_params=pltpu.CompilerParams(
            dimension_semantics=("parallel",)),
        cost_estimate=pl.CostEstimate(
            flops=flops, transcendentals=0, bytes_accessed=bytes_accessed),
    )(x, packed)
    return out[:, :pi_dim], out[:, pi_dim:pi_dim + vf_dim]


# ----------------------------- Module wrapper ------------------------------

class AttentionBiLSTMPallas:
    """JAX/Pallas port of the forward pass of AttentionBiLSTM."""

    def __init__(self, num_classes, hidden_size, num_layers, num_frames,
                 dropout_prob, feature_dim, last_layer_dim_pi=64,
                 last_layer_dim_vf=64, key=None):
        del num_classes, num_layers, num_frames, dropout_prob  # unused in forward
        h0 = hidden_size[0]
        h_half = h0 // 2
        self.latent_dim_pi = last_layer_dim_pi
        self.latent_dim_vf = last_layer_dim_vf
        self.feature_dim = feature_dim

        if key is None:
            key = jax.random.PRNGKey(0)
        ks = jax.random.split(key, 10)

        def linear(kw, kb, fan_in, fan_out):
            # Deterministic init (uniform like PyTorch's default Linear init);
            # weights stored as [in, out] so the kernel computes x @ W + b.
            bound = 1.0 / math.sqrt(fan_in)
            w = jax.random.uniform(kw, (fan_in, fan_out), jnp.float32, -bound, bound)
            b = jax.random.uniform(kb, (1, fan_out), jnp.float32, -bound, bound)
            return w, b

        # policy_net: F -> h0 -> h_half -> last_layer_dim_pi
        self.pw1, self.pb1 = linear(ks[0], ks[1], feature_dim, h0)
        self.pw2, self.pb2 = linear(ks[2], ks[3], h0, h_half)
        self.pw3, self.pb3 = linear(ks[4], ks[5], h_half, last_layer_dim_pi)
        # value_net: F -> h_half -> last_layer_dim_vf
        self.vw1, self.vb1 = linear(ks[6], ks[7], feature_dim, h_half)
        self.vw2, self.vb2 = linear(ks[8], ks[9], h_half, last_layer_dim_vf)

        # ---- host-side packing of the fused / padded parameter slab ----
        # "+1" guarantees a spare lane in h1 and z for the constant-1 bias lane;
        # lane stays 128 for this model (do NOT pad to 256: zero-FLOP padding
        # and a 2x bigger slab for no useful work).
        lane = _round_up(max(h0 + h_half + 1, 2 * h_half + 1,
                             last_layer_dim_pi + last_layer_dim_vf), 128)
        self.lane = lane
        cl = lane - 1                                  # constant-1 lane index

        # L1: concat policy+value first layers along N, zero-pad to `lane`.
        w1_cat = jnp.zeros((feature_dim, lane), jnp.float32)
        w1_cat = w1_cat.at[:, :h0].set(self.pw1)
        w1_cat = w1_cat.at[:, h0:h0 + h_half].set(self.vw1)
        b1_cat = jnp.zeros((1, lane), jnp.float32)
        b1_cat = b1_cat.at[:, :h0].set(self.pb1)
        b1_cat = b1_cat.at[:, h0:h0 + h_half].set(self.vb1)
        b1_cat = b1_cat.at[:, cl].set(1.0)             # plant the constant-1 lane

        # L2: policy mid layer + identity pass-through for the value branch
        # (ReLU idempotent on the already-nonnegative value activations).
        # b2 folded into row `cl`; W2[cl, cl]=1 keeps the constant lane alive.
        w2_cat = jnp.zeros((lane, lane), jnp.float32)
        w2_cat = w2_cat.at[0:h0, 0:h_half].set(self.pw2)
        w2_cat = w2_cat.at[h0:h0 + h_half, h_half:2 * h_half].set(
            jnp.eye(h_half, dtype=jnp.float32))
        w2_cat = w2_cat.at[cl, 0:h_half].set(self.pb2[0])
        w2_cat = w2_cat.at[cl, cl].set(1.0)

        # L3: block-diagonal last layers -> lane-dense [pi | vf] output.
        # b3 / vb2 folded into row `cl`.
        w3_cat = jnp.zeros((lane, lane), jnp.float32)
        w3_cat = w3_cat.at[0:h_half, 0:last_layer_dim_pi].set(self.pw3)
        w3_cat = w3_cat.at[h_half:2 * h_half,
                           last_layer_dim_pi:last_layer_dim_pi + last_layer_dim_vf
                           ].set(self.vw2)
        w3_cat = w3_cat.at[cl, 0:last_layer_dim_pi].set(self.pb3[0])
        w3_cat = w3_cat.at[cl,
                           last_layer_dim_pi:last_layer_dim_pi + last_layer_dim_vf
                           ].set(self.vb2[0])

        bias_block = jnp.zeros((16, lane), jnp.float32)   # sublane-aligned bias tile
        bias_block = bias_block.at[0:1].set(b1_cat)

        # Single contiguous bf16 parameter buffer -> one small DMA per invocation;
        # bf16 operands also avoid the ~3x f32 MXU pass decomposition.
        self.packed = jnp.concatenate(
            [w1_cat, w2_cat, w3_cat, bias_block], axis=0).astype(jnp.bfloat16)

    def _run(self, features):
        return _fused_forward(
            features, self.packed,
            f=self.feature_dim, lane=self.lane,
            pi_dim=self.latent_dim_pi, vf_dim=self.latent_dim_vf)

    def forward(self, features):
        pi, vf = self._run(features)
        return pi, vf

    def forward_actor(self, features):
        return self._run(features)[0]

    def forward_critic(self, features):
        return self._run(features)[1]

    __call__ = forward


# --------------------------------- main ------------------------------------

if __name__ == "__main__":
    B = 8
    FEATURE_DIM = 32
    HIDDEN = (64,)

    model = AttentionBiLSTMPallas(
        num_classes=4,
        hidden_size=HIDDEN,
        num_layers=1,
        num_frames=8,
        dropout_prob=0.1,
        feature_dim=FEATURE_DIM,
        last_layer_dim_pi=64,
        last_layer_dim_vf=64,
        key=jax.random.PRNGKey(42),
    )

    features = jax.random.normal(jax.random.PRNGKey(0), (B, FEATURE_DIM), jnp.float32)

    pi, vf = jax.jit(model.forward)(features)
    pi = jax.block_until_ready(pi)
    vf = jax.block_until_ready(vf)

    # Reference check in plain f32 JAX using the original (unfused) parameters.
    # The kernel runs bf16 operands with f32 accumulation, so tolerance is loosened.
    def ref_forward(x, m):
        h = jnp.maximum(x @ m.pw1 + m.pb1, 0.0)
        h = jnp.maximum(h @ m.pw2 + m.pb2, 0.0)
        pi_ref = h @ m.pw3 + m.pb3
        g = jnp.maximum(x @ m.vw1 + m.vb1, 0.0)
        vf_ref = g @ m.vw2 + m.vb2
        return pi_ref, vf_ref

    pi_ref, vf_ref = ref_forward(features, model)
    assert pi.shape == (B, 64) and vf.shape == (B, 64)
    assert jnp.allclose(pi, pi_ref, atol=5e-2, rtol=5e-2), \
        float(jnp.max(jnp.abs(pi - pi_ref)))
    assert jnp.allclose(vf, vf_ref, atol=5e-2, rtol=5e-2), \
        float(jnp.max(jnp.abs(vf - vf_ref)))

    print("KERNEL_OK")
</pallas_src>

<mosaic_0001>
module attributes {stable_mosaic.version = 11 : i64} {
  func.func @_fused_heads_kernel(%arg0: i32, %arg1: memref<8x32xf32, #tpu.memory_space<vmem>>, %arg2: memref<304x128xbf16, #tpu.memory_space<vmem>>, %arg3: memref<8x128xf32, #tpu.memory_space<vmem>>) attributes {dimension_semantics = [#tpu.dimension_semantics<parallel>], iteration_bounds = array<i64: 1>, scalar_prefetch = 0 : i64, scratch_operands = 0 : i64, tpu.core_type = #tpu.core_type<tc>, window_params = [{transform_indices = @transform_0, window_bounds = array<i64: 8, 32>}, {pipeline_mode = #tpu.pipeline_mode<synchronous>, transform_indices = @transform_1, window_bounds = array<i64: 304, 128>}, {transform_indices = @transform_2, window_bounds = array<i64: 8, 128>}]} {
    %c0 = arith.constant 0 : index
    %c0_0 = arith.constant 0 : index
    %0 = vector.load %arg1[%c0, %c0_0] : memref<8x32xf32, #tpu.memory_space<vmem>>, vector<8x32xf32>
    %1 = arith.truncf %0 : vector<8x32xf32> to vector<8x32xbf16>
    %c0_1 = arith.constant 0 : index
    %c0_2 = arith.constant 0 : index
    %2 = vector.load %arg2[%c0_1, %c0_2] : memref<304x128xbf16, #tpu.memory_space<vmem>>, vector<32x128xbf16>
    %c32 = arith.constant 32 : index
    %c0_3 = arith.constant 0 : index
    %3 = vector.load %arg2[%c32, %c0_3] : memref<304x128xbf16, #tpu.memory_space<vmem>>, vector<128x128xbf16>
    %c160 = arith.constant 160 : index
    %c0_4 = arith.constant 0 : index
    %4 = vector.load %arg2[%c160, %c0_4] : memref<304x128xbf16, #tpu.memory_space<vmem>>, vector<128x128xbf16>
    %c288 = arith.constant 288 : index
    %c0_5 = arith.constant 0 : index
    %5 = vector.load %arg2[%c288, %c0_5] : memref<304x128xbf16, #tpu.memory_space<vmem>>, vector<1x128xbf16>
    %6 = arith.extf %5 : vector<1x128xbf16> to vector<1x128xf32>
    %cst = arith.constant dense<0.000000e+00> : vector<8x128xf32>
    %7 = tpu.matmul %1, %2, %cst {dimension_numbers = #tpu.dot_dimension_numbers<[1], [0], [0], [1], [0, 0, 1, 1], [], []>} : vector<8x32xbf16>, vector<32x128xbf16>, vector<8x128xf32> -> vector<8x128xf32>
    %8 = vector.broadcast %6 : vector<1x128xf32> to vector<8x128xf32>
    %9 = arith.addf %7, %8 : vector<8x128xf32>
    %cst_6 = arith.constant 0.000000e+00 : f32
    %10 = vector.broadcast %cst_6 : f32 to vector<8x128xf32>
    %11 = arith.maximumf %9, %10 : vector<8x128xf32>
    %12 = arith.truncf %11 : vector<8x128xf32> to vector<8x128xbf16>
    %cst_7 = arith.constant dense<0.000000e+00> : vector<8x128xf32>
    %13 = tpu.matmul %12, %3, %cst_7 {dimension_numbers = #tpu.dot_dimension_numbers<[1], [0], [0], [1], [0, 0, 1, 1], [], []>} : vector<8x128xbf16>, vector<128x128xbf16>, vector<8x128xf32> -> vector<8x128xf32>
    %cst_8 = arith.constant 0.000000e+00 : f32
    %14 = vector.broadcast %cst_8 : f32 to vector<8x128xf32>
    %15 = arith.maximumf %13, %14 : vector<8x128xf32>
    %16 = arith.truncf %15 : vector<8x128xf32> to vector<8x128xbf16>
    %cst_9 = arith.constant dense<0.000000e+00> : vector<8x128xf32>
    %17 = tpu.matmul %16, %4, %cst_9 {dimension_numbers = #tpu.dot_dimension_numbers<[1], [0], [0], [1], [0, 0, 1, 1], [], []>} : vector<8x128xbf16>, vector<128x128xbf16>, vector<8x128xf32> -> vector<8x128xf32>
    %c0_10 = arith.constant 0 : index
    %c0_11 = arith.constant 0 : index
    %18 = vector.load %arg3[%c0_10, %c0_11] : memref<8x128xf32, #tpu.memory_space<vmem>>, vector<8x128xf32>
    tpu.vector_store %arg3[%c0_10, %c0_11], %17 {strides = array<i32>} : memref<8x128xf32, #tpu.memory_space<vmem>>, vector<8x128xf32>,
    return
  }
  func.func @transform_0(%arg0: i32) -> (i32, i32) {
    %c0_i32 = arith.constant 0 : i32
    %c0_i32_0 = arith.constant 0 : i32
    return %arg0, %c0_i32 : i32, i32
  }
  func.func @transform_1(%arg0: i32) -> (i32, i32) {
    %c0_i32 = arith.constant 0 : i32
    %c0_i32_0 = arith.constant 0 : i32
    %c0_i32_1 = arith.constant 0 : i32
    return %c0_i32, %c0_i32_0 : i32, i32
  }
  func.func @transform_2(%arg0: i32) -> (i32, i32) {
    %c0_i32 = arith.constant 0 : i32
    %c0_i32_0 = arith.constant 0 : i32
    return %arg0, %c0_i32 : i32, i32
  }
}

</mosaic_0001>

<llo_original>
// kernel: forward.1
$region0: #{forward.1}
  #allocation0 [shape = 'u32[]', space=smem, size = 0x4, offset = 0x4, fixed_abs, tag = 'smem constant byte address 0x4 - core index']
  #allocation1 [shape = 'u32[144,128]{1,0:T(1,128)}', space=vmem, size = 0x12000, scoped, tag = 'internal scratch']
  %s0 = inlined_call_operand.hbm [shape: f32[8,32], index: 0, kind: input, shape index: {}]
  %s1 = inlined_call_operand.hbm [shape: bf16[304,128], index: 1, kind: input, shape index: {}]
  %s2 = inlined_call_operand.vmem [shape: f32[8,128], index: 2, kind: output, shape index: {}]
  %s3 = sld [smem:[#allocation0]]
  $region26: #{forward.1} parent=0
    _
  %s5 = ssub.s32 1, %s3
  %s6 = scalar_select 0, %s5, %s3
  $region1: #{forward.1} parent=0
    #allocation2 [shape = 'u8[4096]{0}', space=vmem, size = 0x1000, scoped, tag = 'input window, operand 0, single buffered']
    #allocation3 [shape = 's32[1]{0}', space=sflag, size = 0x4, scoped, tag = 'scoped memory for forward.1']
    #allocation4 [shape = 'u8[77824]{0}', space=vmem, size = 0x13000, scoped, tag = 'input window, operand 1, single buffered']
    #allocation5 [shape = 's32[1]{0}', space=sflag, size = 0x4, scoped, tag = 'scoped memory for forward.1']
    %7 = vsyncpa [#allocation3], 0
    %8 = vsyncpa [#allocation5], 0
    // Predicated region
    $region2: #{forward.1} parent=1 // pred_check
      _
    $region3: #{forward.1} parent=1 // pred_check_branch
      %10 = sbr.rel (0) target = $region5
    $region4: #{forward.1} parent=1 // pred_region
      %s12 = ssub.s32 128, 128
      %13 = vsyncadd [#allocation3], %s12
      %s15 = sshll.u32 [#allocation2], 4
      %s16 = int_to_ptr.vmem [resolvable:$true] %s15
      %18 = dma.hbm_to_vmem [thread:$0]  %s0, 128, %s16, [#allocation3]
    $region5: #{forward.1} parent=1 // pred_fallthru
      _
    // Predicated region
    $region6: #{forward.1} parent=1 // pred_check
      _
    $region7: #{forward.1} parent=1 // pred_check_branch
      %20 = sbr.rel (0) target = $region9
    $region8: #{forward.1} parent=1 // pred_region
      %s22 = ssub.s32 2432, 2432
      %23 = vsyncadd [#allocation5], %s22
      %s24 = sshll.u32 [#allocation4], 4
      %s25 = int_to_ptr.vmem [resolvable:$true] %s24
      %30 = dma.hbm_to_vmem [thread:$0]  %s1, 2432, %s25, [#allocation5], 64, 64, 4
    $region9: #{forward.1} parent=1 // pred_fallthru
      _
    // Predicated region
    $region10: #{forward.1} parent=1 // pred_check
      _
    $region11: #{forward.1} parent=1 // pred_check_branch
      %32 = sbr.rel (0) target = $region13
    $region12: #{forward.1} parent=1 // pred_region
      %33 = dma.done [#allocation3], 128
    $region13: #{forward.1} parent=1 // pred_fallthru
      _
    // Predicated region
    $region14: #{forward.1} parent=1 // pred_check
      _
    $region15: #{forward.1} parent=1 // pred_check_branch
      %35 = sbr.rel (0) target = $region17
    $region16: #{forward.1} parent=1 // pred_region
      %36 = dma.done [#allocation5], 2432
    $region17: #{forward.1} parent=1 // pred_fallthru
      _
    %v38 = vld [vmem:[#allocation2] sm:$0xff]
    %v39 = vpack.c.bf16 %v38, %v38
    %v40 = vld [vmem:[#allocation4] sm:$0xf]
    %v41 = vld [vmem:[#allocation4 + $0x4] sm:$0xf]
    %v42 = vld [vmem:[#allocation4 + $0x8] sm:$0xf]
    %v43 = vld [vmem:[#allocation4 + $0xc] sm:$0xf]
    %v44 = vld [vmem:[#allocation4 + $0x10] sm:$0xf]
    %v45 = vld [vmem:[#allocation4 + $0x14] sm:$0xf]
    %v46 = vld [vmem:[#allocation4 + $0x18] sm:$0xf]
    %v47 = vld [vmem:[#allocation4 + $0x1c] sm:$0xf]
    %v48 = vld [vmem:[#allocation4 + $0x20] sm:$0xf]
    %v49 = vld [vmem:[#allocation4 + $0x24] sm:$0xf]
    %v50 = vld [vmem:[#allocation4 + $0x28] sm:$0xf]
    %v51 = vld [vmem:[#allocation4 + $0x2c] sm:$0xf]
    %v52 = vld [vmem:[#allocation4 + $0x30] sm:$0xf]
    %v53 = vld [vmem:[#allocation4 + $0x34] sm:$0xf]
    %v54 = vld [vmem:[#allocation4 + $0x38] sm:$0xf]
    %v55 = vld [vmem:[#allocation4 + $0x3c] sm:$0xf]
    %v56 = vld [vmem:[#allocation4 + $0x40] sm:$0xf]
    %v57 = vld [vmem:[#allocation4 + $0x44] sm:$0xf]
    %v58 = vld [vmem:[#allocation4 + $0x48] sm:$0xf]
    %v59 = vld [vmem:[#allocation4 + $0x4c] sm:$0xf]
    %v60 = vld [vmem:[#allocation4 + $0x50] sm:$0xf]
    %v61 = vld [vmem:[#allocation4 + $0x54] sm:$0xf]
    %v62 = vld [vmem:[#allocation4 + $0x58] sm:$0xf]
    %v63 = vld [vmem:[#allocation4 + $0x5c] sm:$0xf]
    %v64 = vld [vmem:[#allocation4 + $0x60] sm:$0xf]
    %v65 = vld [vmem:[#allocation4 + $0x64] sm:$0xf]
    %v66 = vld [vmem:[#allocation4 + $0x68] sm:$0xf]
    %v67 = vld [vmem:[#allocation4 + $0x6c] sm:$0xf]
    %v68 = vld [vmem:[#allocation4 + $0x70] sm:$0xf]
    %v69 = vld [vmem:[#allocation4 + $0x74] sm:$0xf]
    %v70 = vld [vmem:[#allocation4 + $0x78] sm:$0xf]
    %v71 = vld [vmem:[#allocation4 + $0x7c] sm:$0xf]
    %v72 = vld [vmem:[#allocation4 + $0x80] sm:$0xf]
    %v73 = vld [vmem:[#allocation4 + $0x84] sm:$0xf]
    %v74 = vld [vmem:[#allocation4 + $0x88] sm:$0xf]
    %v75 = vld [vmem:[#allocation4 + $0x8c] sm:$0xf]
    %v76 = vld [vmem:[#allocation4 + $0x90] sm:$0x1]
    %v77 = vunpack.c.l.bf16 %v76
    %v78 = vlaneseq
    %v79 = vshrl.u32 %v78, 7
    %v80 = vsub.s32 0, %v79
    %v81 = vrot.slane %v77, %v80
    %v86 = vunpack.c.l.b16 %v40
    %v87 = vunpack.c.l.b16 %v41
    %v88 = vunpack.c.l.b16 %v42
    %v89 = vunpack.c.l.b16 %v43
    %v90 = vpack.c.b16 %v87, %v86
    %v91 = vpack.c.b16 %v89, %v88
    %vm94 = vcmask 261120
    %v96 = vsel %vm94, %v39, 0
    %98 = vmatprep.subr.bf16.mxu0 0
    %99 = vmatpush1.bf16.msra.mxu0 0
    %100 = vmatprep.subr.bf16.mxu0 0
    %101 = vmatpush1.bf16.msra.mxu0 0
    %102 = vmatprep.subr.bf16.mxu0 0
    %103 = vmatpush1.bf16.msra.mxu0 0
    %104 = vmatprep.subr.bf16.mxu0 0
    %105 = vmatpush1.bf16.msra.mxu0 0
    %106 = vmatprep.subr.bf16.mxu0 0
    %107 = vmatpush1.bf16.msra.mxu0 0
    %108 = vmatprep.subr.bf16.mxu0 0
    %109 = vmatpush1.bf16.msra.mxu0 0
    %110 = vmatprep.subr.bf16.mxu0 0
    %111 = vmatpush1.bf16.msra.mxu0 %v91
    %112 = vmatprep.subr.bf16.mxu0 0
    %113 = vmatpush1.bf16.msra.mxu0 %v90
    %114 = vmatprep.subr.bf16.mxu0 0
    %115 = vmatpush2.bf16.msra.mxu0 0
    %116 = vmatprep.subr.bf16.mxu0 0
    %117 = vmatpush2.bf16.msra.mxu0 0
    %118 = vmatprep.subr.bf16.mxu0 0
    %119 = vmatpush2.bf16.msra.mxu0 0
    %120 = vmatprep.subr.bf16.mxu0 0
    %121 = vmatpush2.bf16.msra.mxu0 0
    %122 = vmatprep.subr.bf16.mxu0 0
    %123 = vmatpush2.bf16.msra.mxu0 0
    %124 = vmatprep.subr.bf16.mxu0 0
    %125 = vmatpush2.bf16.msra.mxu0 0
    %126 = vmatprep.subr.bf16.mxu0 0
    %127 = vmatpush2.bf16.msra.mxu0 0
    %128 = vmatprep.subr.bf16.mxu0 0
    %129 = vmatpush2.bf16.msra.mxu0 0
    %130 = vmatprep.mubr.bf16.mxu0 0
    %131 = vmatmul.mubr.bf16.gmra.mxu0 %v96
    %v132 = vpop.f32.mrf.mxu0
    %v133 = vadd.f32 %v81, %v132
    %v134 = vpop.f32.mrf.mxu0
    %v135 = vpop.f32.mrf.mxu0
    %v136 = vpop.f32.mrf.mxu0
    %137 = vdwg.mxu0
    %v138 = vmax.f32 %v133, 0.0
    %v139 = vpack.c.bf16 %v138, %v138
    %v156 = vunpack.c.l.b16 %v44
    %v157 = vunpack.c.l.b16 %v45
    %v158 = vunpack.c.l.b16 %v46
    %v159 = vunpack.c.l.b16 %v47
    %v160 = vunpack.c.l.b16 %v48
    %v161 = vunpack.c.l.b16 %v49
    %v162 = vunpack.c.l.b16 %v50
    %v163 = vunpack.c.l.b16 %v51
    %v164 = vunpack.c.l.b16 %v52
    %v165 = vunpack.c.l.b16 %v53
    %v166 = vunpack.c.l.b16 %v54
    %v167 = vunpack.c.l.b16 %v55
    %v168 = vunpack.c.l.b16 %v56
    %v169 = vunpack.c.l.b16 %v57
    %v170 = vunpack.c.l.b16 %v58
    %v171 = vunpack.c.l.b16 %v59
    %v172 = vpack.c.b16 %v157, %v156
    %v173 = vpack.c.b16 %v159, %v158
    %v174 = vpack.c.b16 %v161, %v160
    %v175 = vpack.c.b16 %v163, %v162
    %v176 = vpack.c.b16 %v165, %v164
    %v177 = vpack.c.b16 %v167, %v166
    %v178 = vpack.c.b16 %v169, %v168
    %v179 = vpack.c.b16 %v171, %v170
    %188 = vmatprep.subr.bf16.mxu0 0
    %189 = vmatpush1.bf16.msra.mxu0 %v179
    %190 = vmatprep.subr.bf16.mxu0 0
    %191 = vmatpush1.bf16.msra.mxu0 %v178
    %192 = vmatprep.subr.bf16.mxu0 0
    %193 = vmatpush1.bf16.msra.mxu0 %v177
    %194 = vmatprep.subr.bf16.mxu0 0
    %195 = vmatpush1.bf16.msra.mxu0 %v176
    %196 = vmatprep.subr.bf16.mxu0 0
    %197 = vmatpush1.bf16.msra.mxu0 %v175
    %198 = vmatprep.subr.bf16.mxu0 0
    %199 = vmatpush1.bf16.msra.mxu0 %v174
    %200 = vmatprep.subr.bf16.mxu0 0
    %201 = vmatpush1.bf16.msra.mxu0 %v173
    %202 = vmatprep.subr.bf16.mxu0 0
    %203 = vmatpush1.bf16.msra.mxu0 %v172
    %204 = vmatprep.subr.bf16.mxu0 0
    %205 = vmatpush2.bf16.msra.mxu0 0
    %206 = vmatprep.subr.bf16.mxu0 0
    %207 = vmatpush2.bf16.msra.mxu0 0
    %208 = vmatprep.subr.bf16.mxu0 0
    %209 = vmatpush2.bf16.msra.mxu0 0
    %210 = vmatprep.subr.bf16.mxu0 0
    %211 = vmatpush2.bf16.msra.mxu0 0
    %212 = vmatprep.subr.bf16.mxu0 0
    %213 = vmatpush2.bf16.msra.mxu0 0
    %214 = vmatprep.subr.bf16.mxu0 0
    %215 = vmatpush2.bf16.msra.mxu0 0
    %216 = vmatprep.subr.bf16.mxu0 0
    %217 = vmatpush2.bf16.msra.mxu0 0
    %218 = vmatprep.subr.bf16.mxu0 0
    %219 = vmatpush2.bf16.msra.mxu0 0
    %220 = vmatprep.mubr.bf16.mxu0 0
    %221 = vmatmul.mubr.bf16.gmra.mxu0 %v139
    %v222 = vpop.f32.mrf.mxu0
    %v223 = vadd.f32 0.0, %v222
    %v224 = vpop.f32.mrf.mxu0
    %v225 = vpop.f32.mrf.mxu0
    %v226 = vpop.f32.mrf.mxu0
    %227 = vdwg.mxu0
    %v228 = vmax.f32 %v223, 0.0
    %v229 = vpack.c.bf16 %v228, %v228
    %v246 = vunpack.c.l.b16 %v60
    %v247 = vunpack.c.l.b16 %v61
    %v248 = vunpack.c.l.b16 %v62
    %v249 = vunpack.c.l.b16 %v63
    %v250 = vunpack.c.l.b16 %v64
    %v251 = vunpack.c.l.b16 %v65
    %v252 = vunpack.c.l.b16 %v66
    %v253 = vunpack.c.l.b16 %v67
    %v254 = vunpack.c.l.b16 %v68
    %v255 = vunpack.c.l.b16 %v69
    %v256 = vunpack.c.l.b16 %v70
    %v257 = vunpack.c.l.b16 %v71
    %v258 = vunpack.c.l.b16 %v72
    %v259 = vunpack.c.l.b16 %v73
    %v260 = vunpack.c.l.b16 %v74
    %v261 = vunpack.c.l.b16 %v75
    %v262 = vpack.c.b16 %v247, %v246
    %v263 = vpack.c.b16 %v249, %v248
    %v264 = vpack.c.b16 %v251, %v250
    %v265 = vpack.c.b16 %v253, %v252
    %v266 = vpack.c.b16 %v255, %v254
    %v267 = vpack.c.b16 %v257, %v256
    %v268 = vpack.c.b16 %v259, %v258
    %v269 = vpack.c.b16 %v261, %v260
    %278 = vmatprep.subr.bf16.mxu0 0
    %279 = vmatpush1.bf16.msra.mxu0 %v269
    %280 = vmatprep.subr.bf16.mxu0 0
    %281 = vmatpush1.bf16.msra.mxu0 %v268
    %282 = vmatprep.subr.bf16.mxu0 0
    %283 = vmatpush1.bf16.msra.mxu0 %v267
    %284 = vmatprep.subr.bf16.mxu0 0
    %285 = vmatpush1.bf16.msra.mxu0 %v266
    %286 = vmatprep.subr.bf16.mxu0 0
    %287 = vmatpush1.bf16.msra.mxu0 %v265
    %288 = vmatprep.subr.bf16.mxu0 0
    %289 = vmatpush1.bf16.msra.mxu0 %v264
    %290 = vmatprep.subr.bf16.mxu0 0
    %291 = vmatpush1.bf16.msra.mxu0 %v263
    %292 = vmatprep.subr.bf16.mxu0 0
    %293 = vmatpush1.bf16.msra.mxu0 %v262
    %294 = vmatprep.subr.bf16.mxu0 0
    %295 = vmatpush2.bf16.msra.mxu0 0
    %296 = vmatprep.subr.bf16.mxu0 0
    %297 = vmatpush2.bf16.msra.mxu0 0
    %298 = vmatprep.subr.bf16.mxu0 0
    %299 = vmatpush2.bf16.msra.mxu0 0
    %300 = vmatprep.subr.bf16.mxu0 0
    %301 = vmatpush2.bf16.msra.mxu0 0
    %302 = vmatprep.subr.bf16.mxu0 0
    %303 = vmatpush2.bf16.msra.mxu0 0
    %304 = vmatprep.subr.bf16.mxu0 0
    %305 = vmatpush2.bf16.msra.mxu0 0
    %306 = vmatprep.subr.bf16.mxu0 0
    %307 = vmatpush2.bf16.msra.mxu0 0
    %308 = vmatprep.subr.bf16.mxu0 0
    %309 = vmatpush2.bf16.msra.mxu0 0
    %310 = vmatprep.mubr.bf16.mxu0 0
    %311 = vmatmul.mubr.bf16.gmra.mxu0 %v229
    %v312 = vpop.f32.mrf.mxu0
    %v313 = vadd.f32 0.0, %v312
    %v314 = vpop.f32.mrf.mxu0
    %v315 = vpop.f32.mrf.mxu0
    %v316 = vpop.f32.mrf.mxu0
    %317 = vdwg.mxu0
    %318 = vst [vmem:[%s2] sm:$0xff] %v313
    // Predicated region
    $region18: #{forward.1} parent=1 // pred_check
      _
    $region19: #{forward.1} parent=1 // pred_check_branch
      %320 = sbr.rel (0) target = $region21
    $region20: #{forward.1} parent=1 // pred_region
      _
    $region21: #{forward.1} parent=1 // pred_fallthru
      _
    // Predicated region
    $region22: #{forward.1} parent=1 // pred_check
      _
    $region23: #{forward.1} parent=1 // pred_check_branch
      %322 = sbr.rel (0) target = $region25
    $region24: #{forward.1} parent=1 // pred_region
      _
    $region25: #{forward.1} parent=1 // pred_fallthru
      _
    %323 = vsyncpa [#allocation3], 1
    %324 = vsyncpa [#allocation5], 1

</llo_original>
